<compile_context>
chip_gen: v6e
topology: v6e:2x2x1
jax: 0.10.0
libtpu: 0.0.40
codegen_flags: <defaults>
</compile_context>

<pallas_src>
import jax
import jax.numpy as jnp
from jax.experimental import pallas as pl
from jax.experimental.pallas import tpu as pltpu


def mf_kernel(u_ref, m_ref, b_ref, o_ref):
    # u_ref : (D, TB) VMEM  -- user_vec with fc weight pre-folded, batch on lanes
    # m_ref : (D, TB) VMEM  -- movie_vec
    # b_ref : (1, 1)  SMEM  -- fc bias scalar
    # o_ref : (1, TB) VMEM  -- lane-dense output block
    u = u_ref[...].astype(jnp.float32)
    m = m_ref[...].astype(jnp.float32)
    # dropout: identity in eval mode (see TODO at top of file)
    y = jnp.sum(u * m, axis=0, keepdims=True) + b_ref[0, 0]   # sublane (XLU) reduce
    o_ref[...] = y.astype(o_ref.dtype)


def prepare_params(user_emb, movie_emb, fc_w, fc_b, *, activation_dtype=jnp.float32):
    """One-time parameter prep (PyTorch layout in, kernel layout out).

    user_emb : (num_users, D)   == nn.Embedding.weight
    movie_emb: (num_movies, D)  == nn.Embedding.weight
    fc_w     : (1, D)           == nn.Linear.weight
    fc_b     : (1,)             == nn.Linear.bias
    """
    # Fold fc weight into the user table and transpose both tables so a
    # column gather puts the batch on the lane axis.
    user_emb_w_t = (user_emb * fc_w[0][None, :]).T.astype(activation_dtype)  # (D, U)
    movie_emb_t = movie_emb.T.astype(activation_dtype)                        # (D, M)
    fc_b_smem = jnp.asarray(fc_b, jnp.float32).reshape(1, 1)                  # SMEM scalar
    return user_emb_w_t, movie_emb_t, fc_b_smem


def mf_forward(user_ids, movie_ids, user_emb_w_t, movie_emb_t, fc_b, *, tb=8192):
    """user_ids, movie_ids: (B,) int32.  Parameters from prepare_params().
    Returns (B,) float32 scores (== PyTorch forward in eval mode)."""
    B = int(user_ids.shape[0])
    D = user_emb_w_t.shape[0]

    # ---- batch tile selection --------------------------------------------
    lanes = 128
    b_blocks = pl.cdiv(B, lanes)               # padded batch in 128-lane blocks
    tb = max(lanes, min(int(tb), 16384))       # review: default 8192, cap 16K
    tb = min(tb, b_blocks * lanes)             # never exceed the padded batch
    # v7x megacore: keep >=2 grid steps when the batch allows it so the
    # "parallel" grid axis can actually shard across both TensorCores.
    if b_blocks >= 2 and pl.cdiv(B, tb) < 2:
        tb = pl.cdiv(b_blocks, 2) * lanes
    tb = max(lanes, (tb // lanes) * lanes)
    B_pad = pl.cdiv(B, tb) * tb
    steps = B_pad // tb
    pad = B_pad - B

    uid = jnp.pad(user_ids, (0, pad))          # padded ids hit row 0 (valid),
    mid = jnp.pad(movie_ids, (0, pad))         # padded outputs are sliced away

    # Embedding lookups.  allow_input_fusion below lets XLA fuse these gather
    # producers into the pallas_call operands under jit (no HBM round-trip).
    user_vec = jnp.take(user_emb_w_t, uid, axis=1)    # (D, B_pad)
    movie_vec = jnp.take(movie_emb_t, mid, axis=1)    # (D, B_pad)

    # ---- VMEM budget -------------------------------------------------------
    act_bytes = D * tb * user_vec.dtype.itemsize
    n_buf = 3 if (tb <= 1024 and steps >= 3) else 2    # deeper buffering for tiny tiles
    vmem_limit = 2 * n_buf * act_bytes + 2 * tb * 4 + (4 << 20)
    vmem_limit = int(min(max(vmem_limit, 16 << 20), 48 << 20))

    act_spec_kwargs = {}
    if n_buf == 3:
        act_spec_kwargs["pipeline_mode"] = pl.Buffered(3)

    out = pl.pallas_call(
        mf_kernel,
        out_shape=jax.ShapeDtypeStruct((1, B_pad), jnp.float32),
        grid_spec=pltpu.PrefetchScalarGridSpec(
            num_scalar_prefetch=0,
            grid=(steps,),
            in_specs=[
                pl.BlockSpec((D, tb), lambda i: (0, i), **act_spec_kwargs),  # user tile
                pl.BlockSpec((D, tb), lambda i: (0, i), **act_spec_kwargs),  # movie tile
                pl.BlockSpec(memory_space=pltpu.MemorySpace.SMEM),           # fc bias
            ],
            out_specs=pl.BlockSpec((1, tb), lambda i: (0, i)),
        ),
        compiler_params=pltpu.CompilerParams(
            dimension_semantics=("parallel",),
            allow_input_fusion=[True, True, False],
            vmem_limit_bytes=vmem_limit,
        ),
    )(user_vec, movie_vec, fc_b)

    return out[0, :B]                                   # squeeze -> (B,)


if __name__ == "__main__":
    num_users, num_movies, D = 10, 12, 32
    B = 8

    key = jax.random.PRNGKey(0)
    k_u, k_m, k_w, k_b, k_uid, k_mid = jax.random.split(key, 6)

    # Parameters in PyTorch layout: nn.Embedding.weight ~ N(0,1),
    # nn.Linear weight/bias ~ U(-1/sqrt(D), 1/sqrt(D)).
    user_emb = jax.random.normal(k_u, (num_users, D), dtype=jnp.float32)
    movie_emb = jax.random.normal(k_m, (num_movies, D), dtype=jnp.float32)
    bound = 1.0 / (D ** 0.5)
    fc_w = jax.random.uniform(k_w, (1, D), minval=-bound, maxval=bound, dtype=jnp.float32)
    fc_b = jax.random.uniform(k_b, (1,), minval=-bound, maxval=bound, dtype=jnp.float32)

    user_ids = jax.random.randint(k_uid, (B,), 0, num_users, dtype=jnp.int32)
    movie_ids = jax.random.randint(k_mid, (B,), 0, num_movies, dtype=jnp.int32)

    # One-time parameter prep (transpose + fc-weight fold).
    user_emb_w_t, movie_emb_t, fc_b_smem = prepare_params(user_emb, movie_emb, fc_w, fc_b)

    # jit the whole forward so allow_input_fusion can fuse the gathers into
    # the pallas_call operand pipeline.
    fwd = jax.jit(mf_forward)
    out = jax.block_until_ready(fwd(user_ids, movie_ids, user_emb_w_t, movie_emb_t, fc_b_smem))

    # Reference in plain JAX directly from PyTorch-layout params
    # (eval-mode dropout == identity).
    ref = (user_emb[user_ids] * movie_emb[movie_ids]) @ fc_w[0] + fc_b[0]    # (B,)

    assert out.shape == (B,)
    assert jnp.allclose(out, ref, atol=1e-5, rtol=1e-5), (out, ref)

    print("KERNEL_OK")
</pallas_src>

<mosaic_0001>
module attributes {stable_mosaic.version = 11 : i64} {
  func.func @mf_kernel(%arg0: i32, %arg1: memref<32x128xf32, #tpu.memory_space<vmem>>, %arg2: memref<32x128xf32, #tpu.memory_space<vmem>>, %arg3: memref<1x1xf32, #tpu.memory_space<smem>>, %arg4: memref<1x128xf32, #tpu.memory_space<vmem>>) attributes {dimension_semantics = [#tpu.dimension_semantics<parallel>], iteration_bounds = array<i64: 1>, scalar_prefetch = 0 : i64, scratch_operands = 0 : i64, tpu.core_type = #tpu.core_type<tc>, window_params = [{transform_indices = @transform_0, window_bounds = array<i64: 32, 128>}, {transform_indices = @transform_1, window_bounds = array<i64: 32, 128>}, {transform_indices = @transform_2, window_bounds = array<i64: 1, 1>}, {transform_indices = @transform_3, window_bounds = array<i64: 1, 128>}]} {
    %c0 = arith.constant 0 : index
    %c0_0 = arith.constant 0 : index
    %0 = vector.load %arg1[%c0, %c0_0] : memref<32x128xf32, #tpu.memory_space<vmem>>, vector<32x128xf32>
    %c0_1 = arith.constant 0 : index
    %c0_2 = arith.constant 0 : index
    %1 = vector.load %arg2[%c0_1, %c0_2] : memref<32x128xf32, #tpu.memory_space<vmem>>, vector<32x128xf32>
    %2 = arith.mulf %0, %1 : vector<32x128xf32>
    %cst = arith.constant dense<0.000000e+00> : vector<128xf32>
    %3 = vector.multi_reduction <add>, %2, %cst [0] : vector<32x128xf32> to vector<128xf32>
    %4 = vector.shape_cast %3 : vector<128xf32> to vector<1x128xf32>
    %c0_3 = arith.constant 0 : index
    %c0_4 = arith.constant 0 : index
    %5 = memref.load %arg3[%c0_3, %c0_4] : memref<1x1xf32, #tpu.memory_space<smem>>
    %6 = vector.broadcast %5 : f32 to vector<1x128xf32>
    %7 = arith.addf %4, %6 : vector<1x128xf32>
    %c0_5 = arith.constant 0 : index
    %c0_6 = arith.constant 0 : index
    %8 = vector.load %arg4[%c0_5, %c0_6] : memref<1x128xf32, #tpu.memory_space<vmem>>, vector<1x128xf32>
    tpu.vector_store %arg4[%c0_5, %c0_6], %7 {strides = array<i32>} : memref<1x128xf32, #tpu.memory_space<vmem>>, vector<1x128xf32>,
    return
  }
  func.func @transform_0(%arg0: i32) -> (i32, i32) {
    %c0_i32 = arith.constant 0 : i32
    %c0_i32_0 = arith.constant 0 : i32
    return %c0_i32, %arg0 : i32, i32
  }
  func.func @transform_1(%arg0: i32) -> (i32, i32) {
    %c0_i32 = arith.constant 0 : i32
    %c0_i32_0 = arith.constant 0 : i32
    return %c0_i32, %arg0 : i32, i32
  }
  func.func @transform_2(%arg0: i32) -> (i32, i32) {
    %c0_i32 = arith.constant 0 : i32
    %c0_i32_0 = arith.constant 0 : i32
    %c0_i32_1 = arith.constant 0 : i32
    return %c0_i32, %c0_i32_0 : i32, i32
  }
  func.func @transform_3(%arg0: i32) -> (i32, i32) {
    %c0_i32 = arith.constant 0 : i32
    %c0_i32_0 = arith.constant 0 : i32
    return %c0_i32, %arg0 : i32, i32
  }
}

</mosaic_0001>

<llo_original>
// kernel: mf_forward.2
$region0: #{mf_forward.2}
  #allocation0 [shape = 'u32[]', space=smem, size = 0x4, offset = 0x4, fixed_abs, tag = 'smem constant byte address 0x4 - core index']
  #allocation1 [shape = 'u32[144,128]{1,0:T(1,128)}', space=vmem, size = 0x12000, scoped, tag = 'internal scratch']
  #allocation2 [shape = 'f32[1,1]{1,0:T(1,128)S(6)}', space=smem, size = 0x200, scoped, tag = 'scoped memory for mf_forward.2']
  %s0 = inlined_call_operand.<no memory space> [shape: f32[1,1], index: 0, kind: input, shape index: {}]
  %s1 = inlined_call_operand.vmem [shape: f32[128,32], index: 1, kind: input, shape index: {}]
  %s2 = inlined_call_operand.vmem [shape: f32[128,32], index: 2, kind: input, shape index: {}]
  %s3 = inlined_call_operand.<no memory space> [shape: f32[], index: 3, kind: input, shape index: {}]
  %s4 = inlined_call_operand.vmem [shape: pred[128], index: 4, kind: input, shape index: {}]
  %s5 = inlined_call_operand.vmem [shape: pred[128], index: 5, kind: input, shape index: {}]
  %s6 = inlined_call_operand.vmem [shape: f32[1,128], index: 6, kind: output, shape index: {}]
  %s7 = sld [smem:[#allocation0]]
  $region30: #{mf_forward.2} parent=0
    _
  %s9 = ssub.s32 1, %s7
  %s10 = scalar_select 0, %s9, %s7
  %v11 = vstv %s3
  %v12 = vstv %s3
  %13 = sst [smem:[#allocation2]] %s0
  $region1: #{mf_forward.2} parent=0
    #allocation3 [shape = 'u8[16384]{0}', space=vmem, size = 0x4000, dematerialized = true, scoped, tag = 'FusionAdapter Buffer %fusion.2 = f32[32,128]{1,0:T(8,128)} fusion(%param_2.15, %param_3.4, %param_5.3), kind=kLoop, calls=%fused_computation.4.clone, metadata={op_name="jit(mf_forward)/jit(_take)/select_n" stack_frame_id=3}']
    #allocation4 [shape = 'u8[16384]{0}', space=vmem, size = 0x4000, dematerialized = true, scoped, tag = 'FusionAdapter Buffer %fusion.1 = f32[32,128]{1,0:T(8,128)} fusion(%param_1.21, %param_3.4, %param_4.4), kind=kLoop, calls=%fused_computation.3.clone, metadata={op_name="jit(mf_forward)/jit(_take)/select_n" stack_frame_id=4}']
    // Predicated region
    $region2: #{mf_forward.2} parent=1 // pred_check
      _
    $region3: #{mf_forward.2} parent=1 // pred_check_branch
      %15 = sbr.rel (0) target = $region5
    $region4: #{mf_forward.2} parent=1 // pred_region
      _
    $region5: #{mf_forward.2} parent=1 // pred_fallthru
      _
    // Predicated region
    $region6: #{mf_forward.2} parent=1 // pred_check
      _
    $region7: #{mf_forward.2} parent=1 // pred_check_branch
      %17 = sbr.rel (0) target = $region9
    $region8: #{mf_forward.2} parent=1 // pred_region
      _
    $region9: #{mf_forward.2} parent=1 // pred_fallthru
      _
    // Predicated region
    $region10: #{mf_forward.2} parent=1 // pred_check
      _
    $region11: #{mf_forward.2} parent=1 // pred_check_branch
      %19 = sbr.rel (0) target = $region13
    $region12: #{mf_forward.2} parent=1 // pred_region
      _
    $region13: #{mf_forward.2} parent=1 // pred_fallthru
      _
    // Predicated region
    $region14: #{mf_forward.2} parent=1 // pred_check
      _
    $region15: #{mf_forward.2} parent=1 // pred_check_branch
      %21 = sbr.rel (0) target = $region17
    $region16: #{mf_forward.2} parent=1 // pred_region
      _
    $region17: #{mf_forward.2} parent=1 // pred_fallthru
      _
    // Predicated region
    $region18: #{mf_forward.2} parent=1 // pred_check
      _
    $region19: #{mf_forward.2} parent=1 // pred_check_branch
      %23 = sbr.rel (0) target = $region21
    $region20: #{mf_forward.2} parent=1 // pred_region
      _
    $region21: #{mf_forward.2} parent=1 // pred_fallthru
      _
    %v24 = vld [vmem:[%s2] sm:$0xff]
    %v25 = vld [vmem:[%s5] ss:$0 sm:$0xff]
    %v27 = vshra.s32 %v25, 0
    %v28 = vand.u32 %v27, 255
    %29 = xla_tuple %v28, %v24, %v11
    %30 = xla_tuple %29
    %vm31 = vcmp.ne.s32.totalorder %v28, 0
    %v32 = vsel %vm31, %v24, %v11
    %33 = xla_tuple %v32
    %s35 = ssub.s32 256, 1
    %36 = vst [vmem:[#allocation3] sm:%s35] %v32
    %s37 = scalar_lea.vmem %s2, 8
    %v38 = vld [vmem:[%s37] sm:$0xff]
    %39 = xla_tuple %v28, %v38, %v11
    %40 = xla_tuple %39
    %vm41 = vcmp.ne.s32.totalorder %v28, 0
    %v42 = vsel %vm41, %v38, %v11
    %43 = xla_tuple %v42
    %s44 = scalar_lea.vmem [#allocation3], 8
    %s46 = ssub.s32 256, 1
    %47 = vst [vmem:[%s44] sm:%s46] %v42
    %s48 = scalar_lea.vmem %s2, 16
    %v49 = vld [vmem:[%s48] sm:$0xff]
    %50 = xla_tuple %v28, %v49, %v11
    %51 = xla_tuple %50
    %vm52 = vcmp.ne.s32.totalorder %v28, 0
    %v53 = vsel %vm52, %v49, %v11
    %54 = xla_tuple %v53
    %s55 = scalar_lea.vmem [#allocation3], 16
    %s57 = ssub.s32 256, 1
    %58 = vst [vmem:[%s55] sm:%s57] %v53
    %s59 = scalar_lea.vmem %s2, 24
    %v60 = vld [vmem:[%s59] sm:$0xff]
    %61 = xla_tuple %v28, %v60, %v11
    %62 = xla_tuple %61
    %vm63 = vcmp.ne.s32.totalorder %v28, 0
    %v64 = vsel %vm63, %v60, %v11
    %65 = xla_tuple %v64
    %s66 = scalar_lea.vmem [#allocation3], 24
    %s68 = ssub.s32 256, 1
    %69 = vst [vmem:[%s66] sm:%s68] %v64
    %v70 = vld [vmem:[%s1] sm:$0xff]
    %v71 = vld [vmem:[%s4] ss:$0 sm:$0xff]
    %v73 = vshra.s32 %v71, 0
    %v74 = vand.u32 %v73, 255
    %75 = xla_tuple %v74, %v70, %v12
    %76 = xla_tuple %75
    %vm77 = vcmp.ne.s32.totalorder %v74, 0
    %v78 = vsel %vm77, %v70, %v12
    %79 = xla_tuple %v78
    %s81 = ssub.s32 256, 1
    %82 = vst [vmem:[#allocation4] sm:%s81] %v78
    %s83 = scalar_lea.vmem %s1, 8
    %v84 = vld [vmem:[%s83] sm:$0xff]
    %85 = xla_tuple %v74, %v84, %v12
    %86 = xla_tuple %85
    %vm87 = vcmp.ne.s32.totalorder %v74, 0
    %v88 = vsel %vm87, %v84, %v12
    %89 = xla_tuple %v88
    %s90 = scalar_lea.vmem [#allocation4], 8
    %s92 = ssub.s32 256, 1
    %93 = vst [vmem:[%s90] sm:%s92] %v88
    %s94 = scalar_lea.vmem %s1, 16
    %v95 = vld [vmem:[%s94] sm:$0xff]
    %96 = xla_tuple %v74, %v95, %v12
    %97 = xla_tuple %96
    %vm98 = vcmp.ne.s32.totalorder %v74, 0
    %v99 = vsel %vm98, %v95, %v12
    %100 = xla_tuple %v99
    %s101 = scalar_lea.vmem [#allocation4], 16
    %s103 = ssub.s32 256, 1
    %104 = vst [vmem:[%s101] sm:%s103] %v99
    %s105 = scalar_lea.vmem %s1, 24
    %v106 = vld [vmem:[%s105] sm:$0xff]
    %107 = xla_tuple %v74, %v106, %v12
    %108 = xla_tuple %107
    %vm109 = vcmp.ne.s32.totalorder %v74, 0
    %v110 = vsel %vm109, %v106, %v12
    %111 = xla_tuple %v110
    %s112 = scalar_lea.vmem [#allocation4], 24
    %s114 = ssub.s32 256, 1
    %115 = vst [vmem:[%s112] sm:%s114] %v110
    %v116 = vld [vmem:[#allocation3] sm:$0xff]
    %v117 = vld [vmem:[#allocation3 + $0x8] sm:$0xff]
    %v118 = vld [vmem:[#allocation3 + $0x10] sm:$0xff]
    %v119 = vld [vmem:[#allocation3 + $0x18] sm:$0xff]
    %v120 = vld [vmem:[#allocation4] sm:$0xff]
    %v121 = vld [vmem:[#allocation4 + $0x8] sm:$0xff]
    %v122 = vld [vmem:[#allocation4 + $0x10] sm:$0xff]
    %v123 = vld [vmem:[#allocation4 + $0x18] sm:$0xff]
    %v124 = vmul.f32 %v116, %v120
    %v125 = vmul.f32 %v117, %v121
    %v126 = vmul.f32 %v118, %v122
    %v127 = vmul.f32 %v119, %v123
    %v128 = vadd.f32 %v124, %v125
    %v129 = vadd.f32 %v128, %v126
    %v130 = vadd.f32 %v129, %v127
    %v131 = vrot.slane %v130, 4
    %v132 = vadd.f32 %v130, %v131
    %v133 = vrot.slane %v132, 2
    %v134 = vadd.f32 %v132, %v133
    %v135 = vrot.slane %v134, 1
    %v136 = vadd.f32 %v134, %v135
    %s137 = sld [smem:[#allocation2]]
    %v138 = vstv %s137
    %v139 = vadd.f32 %v136, %v138
    %140 = vst [vmem:[%s6] sm:$0x1] %v139
    // Predicated region
    $region22: #{mf_forward.2} parent=1 // pred_check
      _
    $region23: #{mf_forward.2} parent=1 // pred_check_branch
      %142 = sbr.rel (0) target = $region25
    $region24: #{mf_forward.2} parent=1 // pred_region
      _
    $region25: #{mf_forward.2} parent=1 // pred_fallthru
      _
    // Predicated region
    $region26: #{mf_forward.2} parent=1 // pred_check
      _
    $region27: #{mf_forward.2} parent=1 // pred_check_branch
      %144 = sbr.rel (0) target = $region29
    $region28: #{mf_forward.2} parent=1 // pred_region
      _
    $region29: #{mf_forward.2} parent=1 // pred_fallthru
      _

</llo_original>
